<compile_context>
chip_gen: v7x
topology: tpu7x:2x2x1
jax: 0.10.0
libtpu: 0.0.40
codegen_flags: <defaults>
</compile_context>

<pallas_src>
import math

import jax
import jax.numpy as jnp
from jax.experimental import pallas as pl
from jax.experimental.pallas import tpu as pltpu


# ---------------------------------------------------------------------------
# Kernel
# ---------------------------------------------------------------------------
def attention_gate_kernel(x_ref, g_ref, wx_ref, wg_ref, bxg_ref, wpsi_ref,
                          bpsi_ref, out_ref):
    # Upcast right after load: no-op for f32, correct bf16 handling on v5e
    # (no bf16 VPU/EUP there); MXU accumulation is f32 either way.
    x = x_ref[...].astype(jnp.float32)                    # (Cin, TN)
    g = g_ref[...].astype(jnp.float32)                    # (Cg,  TN)

    # 1x1 convs in channels-first layout: (Cout, Cin) @ (Cin, TN).
    x_proj = jnp.dot(wx_ref[...], x, preferred_element_type=jnp.float32)
    g_proj = jnp.dot(wg_ref[...], g, preferred_element_type=jnp.float32)

    # Single fused bias (bx + bg precomputed in the wrapper) + ReLU.
    combined = jnp.maximum(x_proj + g_proj + bxg_ref[...], 0.0)   # (Cin_pad, TN)

    # psi projection (output width 1).
    if wpsi_ref.shape[0] == 1:
        # Large Cin: (1, Cin_pad) @ (Cin_pad, TN) on the MXU (slot has slack).
        alpha = jnp.dot(wpsi_ref[...], combined,
                        preferred_element_type=jnp.float32)       # (1, TN)
    else:
        # Small Cin: VPU multiply + sublane reduce (avoids a width-1 matmul).
        alpha = jnp.sum(combined * wpsi_ref[...], axis=0, keepdims=True)

    alpha = jax.nn.sigmoid(alpha + bpsi_ref[0, 0])                # (1, TN)

    out_ref[...] = (x * alpha).astype(out_ref.dtype)              # broadcast over C


# ---------------------------------------------------------------------------
# Sizing helpers
# ---------------------------------------------------------------------------
def _round_up(n, m):
    return ((n + m - 1) // m) * m


def _tpu_vmem_capacity_bytes():
    """Physical VMEM of the current chip; conservative fallback = 64 MiB (v7x)."""
    try:
        info = pltpu.get_tpu_info()
        for attr in ("vmem_capacity_bytes", "vmem_bytes"):
            v = getattr(info, attr, None)
            if v:
                return int(v)
    except Exception:
        pass
    return 64 * 1024 * 1024


def _pick_pixel_tile(hw, cin, cg, cin_pad, io_itemsize, budget_bytes):
    """Largest lane tile (multiple of 128) whose per-step working set fits budget.

    Per lane column:
      * x, g, out I/O blocks (double-buffered by the pipeline)
      * x_proj / g_proj / combined f32 intermediates (single-buffered)
    """
    per_lane = (io_itemsize * 2 * (2 * cin + cg)   # double-buffered x + g + out
                + 4 * 3 * cin_pad)                 # f32 intermediates
    cap = (budget_bytes // per_lane) // 128 * 128
    cap = max(128, min(cap, 128 * 1024))           # keep block shapes sane
    if hw <= cap:
        return hw                                  # full-extent block (always legal)
    return cap                                     # cdiv grid pads the last block


# ---------------------------------------------------------------------------
# Wrapper
# ---------------------------------------------------------------------------
def attention_gate(x_nchw, g_nchw, params, *, tn=None):
    B, Cin, H, W = x_nchw.shape
    Bg, Cg, Hg, Wg_ = g_nchw.shape
    assert (Bg, Hg, Wg_) == (B, H, W)
    HW = H * W

    wx, bx, wg, bg, wpsi, bpsi = params   # wx:(Cin,Cin) wg:(Cin,Cg) wpsi:(Cin,1) bpsi:(1,1)

    # Generation-aware sizing: 128 MiB VMEM on v5e/v6e, 64 MiB on v7x.
    vmem_cap = _tpu_vmem_capacity_bytes()
    vmem_limit = (vmem_cap * 3) // 4               # 96 MiB v5e/v6e, 48 MiB v7x
    tile_budget = vmem_cap // 4                    # 32 MiB v5e/v6e, 16 MiB v7x

    # Pad projection *output* channels to the f32 sublane quantum (8) so the
    # (Cin_pad, TN) intermediates use full vregs.  One-time tiny pad of the
    # weights/biases only; inputs are untouched (no extra HBM traffic).
    cin_pad = _round_up(Cin, 8)
    pad_rows = cin_pad - Cin
    f32 = jnp.float32
    wx_p = jnp.pad(wx.astype(f32), ((0, pad_rows), (0, 0)))          # (Cin_pad, Cin)
    wg_p = jnp.pad(wg.astype(f32), ((0, pad_rows), (0, 0)))          # (Cin_pad, Cg)
    bxg_p = jnp.pad((bx + bg).astype(f32), ((0, pad_rows), (0, 0)))  # fused bias
    wpsi_p = jnp.pad(wpsi.astype(f32), ((0, pad_rows), (0, 0)))      # (Cin_pad, 1)
    if cin_pad >= 128:
        wpsi_p = wpsi_p.T                                            # (1, Cin_pad) -> MXU path
    bpsi_p = bpsi.astype(f32).reshape(1, 1)

    io_itemsize = x_nchw.dtype.itemsize
    if tn is None:
        tn = _pick_pixel_tile(HW, Cin, Cg, cin_pad, io_itemsize, tile_budget)
    tn = min(tn, HW)

    # Pure reshapes (no transposes, no extra HBM traffic).
    x3 = x_nchw.reshape(B, Cin, HW)
    g3 = g_nchw.reshape(B, Cg, HW)

    # Pixel axis leads (long axis; B is often 1-2) so core sharding balances.
    grid = (pl.cdiv(HW, tn), B)
    # TODO(synk): on v7x, pltpu.CORE_PARALLEL on the pixel axis (or pl.core_map
    # over create_tensorcore_mesh) guarantees the 2-TC split; "parallel" kept
    # here so the same code compiles on single-TC v5e/v6e.

    nbytes = io_itemsize
    cost = pl.CostEstimate(
        flops=2 * B * HW * (cin_pad * Cin + cin_pad * Cg + cin_pad) + B * HW * Cin,
        transcendentals=B * HW,                    # sigmoid
        bytes_accessed=nbytes * (2 * x3.size + g3.size)
        + 4 * (wx_p.size + wg_p.size + bxg_p.size + wpsi_p.size + bpsi_p.size),
    )

    out3 = pl.pallas_call(
        attention_gate_kernel,
        out_shape=jax.ShapeDtypeStruct((B, Cin, HW), x_nchw.dtype),
        grid_spec=pltpu.PrefetchScalarGridSpec(
            num_scalar_prefetch=0,
            grid=grid,
            in_specs=[
                pl.BlockSpec((None, Cin, tn), lambda j, b: (b, 0, j)),   # x pixels
                pl.BlockSpec((None, Cg, tn), lambda j, b: (b, 0, j)),    # g pixels
                pl.BlockSpec(wx_p.shape, lambda j, b: (0, 0)),           # Wx (resident)
                pl.BlockSpec(wg_p.shape, lambda j, b: (0, 0)),           # Wg
                pl.BlockSpec(bxg_p.shape, lambda j, b: (0, 0)),          # bx + bg
                pl.BlockSpec(wpsi_p.shape, lambda j, b: (0, 0)),         # psi weight
                pl.BlockSpec(memory_space=pltpu.MemorySpace.SMEM),       # bpsi scalar
            ],
            out_specs=pl.BlockSpec((None, Cin, tn), lambda j, b: (b, 0, j)),
        ),
        compiler_params=pltpu.CompilerParams(
            dimension_semantics=("parallel", "parallel"),
            vmem_limit_bytes=int(vmem_limit),
        ),
        cost_estimate=cost,
    )(x3, g3, wx_p, wg_p, bxg_p, wpsi_p, bpsi_p)

    return out3.reshape(B, Cin, H, W)


# ---------------------------------------------------------------------------
# Params / reference
# ---------------------------------------------------------------------------
def init_params(key, in_channels, gating_channels, dtype=jnp.float32):
    """Deterministic init mimicking nn.Conv2d default (uniform +-1/sqrt(fan_in)).

    Weights are channels-first (Cout, Cin); biases are (C, 1) columns so they
    broadcast over the pixel (lane) axis inside the kernel.
    """
    ks = jax.random.split(key, 6)

    def u(k, shape, fan_in):
        bound = 1.0 / math.sqrt(fan_in)
        return jax.random.uniform(k, shape, dtype, minval=-bound, maxval=bound)

    wx = u(ks[0], (in_channels, in_channels), in_channels)
    bx = u(ks[1], (in_channels, 1), in_channels)
    wg = u(ks[2], (in_channels, gating_channels), gating_channels)
    bg = u(ks[3], (in_channels, 1), gating_channels)
    wpsi = u(ks[4], (in_channels, 1), in_channels)
    bpsi = u(ks[5], (1, 1), in_channels)
    return (wx, bx, wg, bg, wpsi, bpsi)


def attention_gate_ref(x, g, params):
    """Pure-JAX reference (channels-first, identical to the PyTorch module)."""
    wx, bx, wg, bg, wpsi, bpsi = params
    hi = jax.lax.Precision.HIGHEST
    x_proj = jnp.einsum('oi,bihw->bohw', wx, x, precision=hi) + bx[:, 0][None, :, None, None]
    g_proj = jnp.einsum('oi,bihw->bohw', wg, g, precision=hi) + bg[:, 0][None, :, None, None]
    combined = jax.nn.relu(x_proj + g_proj)
    alpha = jnp.einsum('i,bihw->bhw', wpsi[:, 0], combined,
                       precision=hi)[:, None, :, :] + bpsi[0, 0]
    alpha = jax.nn.sigmoid(alpha)
    return x * alpha


if __name__ == "__main__":
    B, Cin, Cg, H, W = 2, 4, 8, 16, 16

    key = jax.random.PRNGKey(0)
    kx, kg, kp = jax.random.split(key, 3)
    x = jax.random.normal(kx, (B, Cin, H, W), dtype=jnp.float32)
    g = jax.random.normal(kg, (B, Cg, H, W), dtype=jnp.float32)
    params = init_params(kp, Cin, Cg)

    out = attention_gate(x, g, params)
    out = jax.block_until_ready(out)

    ref = attention_gate_ref(x, g, params)
    assert out.shape == (B, Cin, H, W)
    assert jnp.allclose(out, ref, atol=1e-4, rtol=1e-4), "mismatch vs reference"

    print("KERNEL_OK")
</pallas_src>

<mosaic_0001>
module attributes {stable_mosaic.version = 11 : i64} {
  func.func @attention_gate_kernel(%arg0: i32, %arg1: i32, %arg2: memref<1x4x256xf32, #tpu.memory_space<vmem>>, %arg3: memref<1x8x256xf32, #tpu.memory_space<vmem>>, %arg4: memref<8x4xf32, #tpu.memory_space<vmem>>, %arg5: memref<8x8xf32, #tpu.memory_space<vmem>>, %arg6: memref<8x1xf32, #tpu.memory_space<vmem>>, %arg7: memref<8x1xf32, #tpu.memory_space<vmem>>, %arg8: memref<1x1xf32, #tpu.memory_space<smem>>, %arg9: memref<1x4x256xf32, #tpu.memory_space<vmem>>) attributes {dimension_semantics = [#tpu.dimension_semantics<parallel>, #tpu.dimension_semantics<parallel>], iteration_bounds = array<i64: 1, 2>, scalar_prefetch = 0 : i64, scratch_operands = 0 : i64, tpu.core_type = #tpu.core_type<tc>, window_params = [{transform_indices = @transform_0, window_bounds = array<i64: 1, 4, 256>}, {transform_indices = @transform_1, window_bounds = array<i64: 1, 8, 256>}, {pipeline_mode = #tpu.pipeline_mode<synchronous>, transform_indices = @transform_2, window_bounds = array<i64: 8, 4>}, {pipeline_mode = #tpu.pipeline_mode<synchronous>, transform_indices = @transform_3, window_bounds = array<i64: 8, 8>}, {pipeline_mode = #tpu.pipeline_mode<synchronous>, transform_indices = @transform_4, window_bounds = array<i64: 8, 1>}, {pipeline_mode = #tpu.pipeline_mode<synchronous>, transform_indices = @transform_5, window_bounds = array<i64: 8, 1>}, {transform_indices = @transform_6, window_bounds = array<i64: 1, 1>}, {transform_indices = @transform_7, window_bounds = array<i64: 1, 4, 256>}]} {
    %c0 = arith.constant 0 : index
    %c0_0 = arith.constant 0 : index
    %c0_1 = arith.constant 0 : index
    %0 = vector.load %arg2[%c0, %c0_0, %c0_1] : memref<1x4x256xf32, #tpu.memory_space<vmem>>, vector<1x4x256xf32>
    %1 = vector.shape_cast %0 : vector<1x4x256xf32> to vector<4x256xf32>
    %c0_2 = arith.constant 0 : index
    %c0_3 = arith.constant 0 : index
    %c0_4 = arith.constant 0 : index
    %2 = vector.load %arg3[%c0_2, %c0_3, %c0_4] : memref<1x8x256xf32, #tpu.memory_space<vmem>>, vector<1x8x256xf32>
    %3 = vector.shape_cast %2 : vector<1x8x256xf32> to vector<8x256xf32>
    %c0_5 = arith.constant 0 : index
    %c0_6 = arith.constant 0 : index
    %4 = vector.load %arg4[%c0_5, %c0_6] : memref<8x4xf32, #tpu.memory_space<vmem>>, vector<8x4xf32>
    %cst = arith.constant dense<0.000000e+00> : vector<8x256xf32>
    %5 = tpu.matmul %4, %1, %cst {dimension_numbers = #tpu.dot_dimension_numbers<[1], [0], [0], [1], [0, 0, 1, 1], [], []>} : vector<8x4xf32>, vector<4x256xf32>, vector<8x256xf32> -> vector<8x256xf32>
    %c0_7 = arith.constant 0 : index
    %c0_8 = arith.constant 0 : index
    %6 = vector.load %arg5[%c0_7, %c0_8] : memref<8x8xf32, #tpu.memory_space<vmem>>, vector<8x8xf32>
    %cst_9 = arith.constant dense<0.000000e+00> : vector<8x256xf32>
    %7 = tpu.matmul %6, %3, %cst_9 {dimension_numbers = #tpu.dot_dimension_numbers<[1], [0], [0], [1], [0, 0, 1, 1], [], []>} : vector<8x8xf32>, vector<8x256xf32>, vector<8x256xf32> -> vector<8x256xf32>
    %8 = arith.addf %5, %7 : vector<8x256xf32>
    %c0_10 = arith.constant 0 : index
    %c0_11 = arith.constant 0 : index
    %9 = vector.load %arg6[%c0_10, %c0_11] : memref<8x1xf32, #tpu.memory_space<vmem>>, vector<8x1xf32>
    %10 = vector.broadcast %9 : vector<8x1xf32> to vector<8x256xf32>
    %11 = arith.addf %8, %10 : vector<8x256xf32>
    %cst_12 = arith.constant 0.000000e+00 : f32
    %12 = vector.broadcast %cst_12 : f32 to vector<8x256xf32>
    %13 = arith.maximumf %11, %12 : vector<8x256xf32>
    %c0_13 = arith.constant 0 : index
    %c0_14 = arith.constant 0 : index
    %14 = vector.load %arg7[%c0_13, %c0_14] : memref<8x1xf32, #tpu.memory_space<vmem>>, vector<8x1xf32>
    %15 = vector.broadcast %14 : vector<8x1xf32> to vector<8x256xf32>
    %16 = arith.mulf %13, %15 : vector<8x256xf32>
    %cst_15 = arith.constant dense<0.000000e+00> : vector<256xf32>
    %17 = vector.multi_reduction <add>, %16, %cst_15 [0] : vector<8x256xf32> to vector<256xf32>
    %18 = vector.shape_cast %17 : vector<256xf32> to vector<1x256xf32>
    %c0_16 = arith.constant 0 : index
    %c0_17 = arith.constant 0 : index
    %19 = memref.load %arg8[%c0_16, %c0_17] : memref<1x1xf32, #tpu.memory_space<smem>>
    %20 = vector.broadcast %19 : f32 to vector<1x256xf32>
    %21 = arith.addf %18, %20 : vector<1x256xf32>
    %22 = arith.negf %21 : vector<1x256xf32>
    %23 = math.exp %22 : vector<1x256xf32>
    %cst_18 = arith.constant 1.000000e+00 : f32
    %24 = vector.broadcast %cst_18 : f32 to vector<1x256xf32>
    %25 = arith.addf %24, %23 : vector<1x256xf32>
    %26 = arith.divf %24, %25 : vector<1x256xf32>
    %27 = vector.broadcast %26 : vector<1x256xf32> to vector<4x256xf32>
    %28 = arith.mulf %1, %27 : vector<4x256xf32>
    %c0_19 = arith.constant 0 : index
    %c0_20 = arith.constant 0 : index
    %c0_21 = arith.constant 0 : index
    %29 = vector.load %arg9[%c0_19, %c0_20, %c0_21] : memref<1x4x256xf32, #tpu.memory_space<vmem>>, vector<1x4x256xf32>
    %30 = vector.shape_cast %29 : vector<1x4x256xf32> to vector<4x256xf32>
    %31 = vector.shape_cast %28 : vector<4x256xf32> to vector<1x4x256xf32>
    tpu.vector_store %arg9[%c0_19, %c0_20, %c0_21], %31 {strides = array<i32>} : memref<1x4x256xf32, #tpu.memory_space<vmem>>, vector<1x4x256xf32>,
    return
  }
  func.func @transform_0(%arg0: i32, %arg1: i32) -> (i32, i32, i32) {
    %c0_i32 = arith.constant 0 : i32
    %c0_i32_0 = arith.constant 0 : i32
    return %arg1, %c0_i32, %arg0 : i32, i32, i32
  }
  func.func @transform_1(%arg0: i32, %arg1: i32) -> (i32, i32, i32) {
    %c0_i32 = arith.constant 0 : i32
    %c0_i32_0 = arith.constant 0 : i32
    return %arg1, %c0_i32, %arg0 : i32, i32, i32
  }
  func.func @transform_2(%arg0: i32, %arg1: i32) -> (i32, i32) {
    %c0_i32 = arith.constant 0 : i32
    %c0_i32_0 = arith.constant 0 : i32
    %c0_i32_1 = arith.constant 0 : i32
    return %c0_i32, %c0_i32_0 : i32, i32
  }
  func.func @transform_3(%arg0: i32, %arg1: i32) -> (i32, i32) {
    %c0_i32 = arith.constant 0 : i32
    %c0_i32_0 = arith.constant 0 : i32
    %c0_i32_1 = arith.constant 0 : i32
    return %c0_i32, %c0_i32_0 : i32, i32
  }
  func.func @transform_4(%arg0: i32, %arg1: i32) -> (i32, i32) {
    %c0_i32 = arith.constant 0 : i32
    %c0_i32_0 = arith.constant 0 : i32
    %c0_i32_1 = arith.constant 0 : i32
    return %c0_i32, %c0_i32_0 : i32, i32
  }
  func.func @transform_5(%arg0: i32, %arg1: i32) -> (i32, i32) {
    %c0_i32 = arith.constant 0 : i32
    %c0_i32_0 = arith.constant 0 : i32
    %c0_i32_1 = arith.constant 0 : i32
    return %c0_i32, %c0_i32_0 : i32, i32
  }
  func.func @transform_6(%arg0: i32, %arg1: i32) -> (i32, i32) {
    %c0_i32 = arith.constant 0 : i32
    %c0_i32_0 = arith.constant 0 : i32
    %c0_i32_1 = arith.constant 0 : i32
    return %c0_i32, %c0_i32_0 : i32, i32
  }
  func.func @transform_7(%arg0: i32, %arg1: i32) -> (i32, i32, i32) {
    %c0_i32 = arith.constant 0 : i32
    %c0_i32_0 = arith.constant 0 : i32
    return %arg1, %c0_i32, %arg0 : i32, i32, i32
  }
}

</mosaic_0001>

<llo_original>
// kernel: tpu_custom_call.1
$region0: #{tpu_custom_call.1}
  #allocation0 [shape = 'u32[]', space=smem, size = 0x4, offset = 0x4, fixed_abs, tag = 'smem constant byte address 0x4 - core index']
  #allocation1 [shape = 'u32[144,128]{1,0:T(1,128)}', space=vmem, size = 0x12000, scoped, tag = 'internal scratch']
  #allocation2 [shape = 'f32[1,1]{1,0:T(1,128)S(6)}', space=smem, size = 0x200, scoped, tag = 'scoped memory for tpu_custom_call.1']
  %s0 = inlined_call_operand.hbm [shape: f32[2,4,256], index: 0, kind: input, shape index: {}]
  %s1 = inlined_call_operand.vmem [shape: f32[2,8,256], index: 1, kind: input, shape index: {}]
  %s2 = inlined_call_operand.vmem [shape: f32[8,4], index: 2, kind: input, shape index: {}]
  %s3 = inlined_call_operand.vmem [shape: f32[8,8], index: 3, kind: input, shape index: {}]
  %s4 = inlined_call_operand.vmem [shape: f32[8,1], index: 4, kind: input, shape index: {}]
  %s5 = inlined_call_operand.vmem [shape: f32[8,1], index: 5, kind: input, shape index: {}]
  %s6 = inlined_call_operand.<no memory space> [shape: f32[1,1], index: 6, kind: input, shape index: {}]
  %s7 = inlined_call_operand.hbm [shape: f32[2,4,256], index: 7, kind: output, shape index: {}]
  %s8 = sld [smem:[#allocation0]]
  $region65: #{tpu_custom_call.1} parent=0
    _
  %s10 = ssub.s32 1, %s8
  %s11 = scalar_select 0, %s10, %s8
  %12 = sst [smem:[#allocation2]] %s6
  $region1: #{tpu_custom_call.1} parent=0
    #allocation3 [shape = 'u8[8192]{0}', space=vmem, size = 0x2000, scoped, tag = 'input window, operand 0']
    #allocation4 [shape = 's32[2]{0}', space=sflag, size = 0x8, scoped, tag = 'scoped memory for tpu_custom_call.1']
    #allocation5 [shape = 's32[2]{0}', space=sflag, size = 0x8, scoped, tag = 'scoped memory for tpu_custom_call.1']
    #allocation6 [shape = 'u8[8192]{0}', space=vmem, size = 0x2000, scoped, tag = 'output window, operand 0']
    %13 = vsyncpa [#allocation4], 0
    %s14 = scalar_lea.sflag [#allocation4], 1
    %15 = vsyncpa %s14, 0
    %16 = vsyncpa [#allocation5], 0
    %s17 = scalar_lea.sflag [#allocation5], 1
    %18 = vsyncpa %s17, 0
    loop: start=0, step=1, limit=4
    $region2: #{tpu_custom_call.1} parent=1 // loop_pre_header
      _
    $region3: #{tpu_custom_call.1} parent=1 // loop_header
      %s20 = sphi 0, %s24
      %p21 = scmp.ge.s32.totalorder %s20, 4
      %s27 = sphi 0, %s39
      %s28 = sphi 0, %s35
      %s29 = sphi 0, %s27
      %s30 = sphi 0, %s28
      %s31 = sphi 0, %s29
      %s32 = sphi 0, %s30
      %s44 = sphi 0, %s46
      %s47 = sphi 0, %s44
      %s48 = sphi 0, %s47
      %s64 = sphi 0, %s48
      %s72 = sphi 0, %s74
      %s75 = sphi 0, %s72
      %s76 = sphi 0, %s75
      %s92 = sphi 0, %s76
      %s96 = sphi 0, %s96
      %s98 = sphi 0, %s96
      %s99 = sphi 0, %s98
      %s113 = sphi 0, %s99
      %s117 = sphi 0, %s117
      %s119 = sphi 0, %s117
      %s120 = sphi 0, %s119
      %s134 = sphi 0, %s120
      %s138 = sphi 0, %s138
      %s140 = sphi 0, %s138
      %s141 = sphi 0, %s140
      %s155 = sphi 0, %s141
      %s159 = sphi 0, %s159
      %s161 = sphi 0, %s159
      %s162 = sphi 0, %s161
      %s176 = sphi 0, %s162
      %s180 = sphi 0, %s180
      %s182 = sphi 0, %s180
      %s183 = sphi 0, %s182
      %s197 = sphi 0, %s183
      %s205 = sphi 0, %s207
      %s208 = sphi 0, %s205
      %s209 = sphi 0, %s208
      %s225 = sphi 0, %s209
    $region4: #{tpu_custom_call.1} parent=1 // loop_header_branch
      %23 = sbr.rel (%p21) target = $region8
    $region5: #{tpu_custom_call.1} parent=1 // loop_body
      %s25 = ssub.s32 %s20, 1
      %s26 = ssub.s32 %s20, 2
      %s33 = sadd.s32 1, %s28
      %p34 = scmp.ge.s32.totalorder %s33, 2
      %s35 = scalar_select %p34, 0, %s33
      %s36 = sadd.s32 1, %s27
      %s37 = scalar_select %p34, %s36, %s27
      %p38 = scmp.ge.s32.totalorder %s37, 1
      %s39 = scalar_select %p38, 0, %s37
      %s40 = ssub.s32 %s28, %s35
      %s41 = ssub.s32 %s27, %s39
      %s42 = sor.u32 %s40, %s41
      %p43 = scmp.eq.s32.totalorder %s42, 0
      %s45 = sadd.s32 %s44, 1
      %s46 = scalar_select %p43, %s44, %s45
      %p49 = pneg %p43
      %p50 = scmp.eq.s32.totalorder %s20, 1
      %p51 = por %p49, %p50
      %p52 = scmp.ne.s32.totalorder %s44, %s47
      %p53 = scmp.eq.s32.totalorder %s20, 0
      %p54 = por %p52, %p53
      %p55 = scmp.ne.s32.totalorder %s44, %s47
      %p56 = scmp.eq.s32.totalorder %s25, 1
      %p57 = por %p55, %p56
      %p58 = scmp.ne.s32.totalorder %s47, %s48
      %p59 = scmp.eq.s32.totalorder %s25, 0
      %p60 = por %p58, %p59
      %p61 = scmp.ne.s32.totalorder %s47, %s48
      %p62 = scmp.eq.s32.totalorder %s26, 1
      %p63 = por %p61, %p62
      %p65 = scmp.ne.s32.totalorder %s48, %s64
      %p66 = scmp.eq.s32.totalorder %s26, 0
      %p67 = por %p65, %p66
      %s68 = ssub.s32 %s28, %s35
      %s69 = ssub.s32 %s27, %s39
      %s70 = sor.u32 %s68, %s69
      %p71 = scmp.eq.s32.totalorder %s70, 0
      %s73 = sadd.s32 %s72, 1
      %s74 = scalar_select %p71, %s72, %s73
      %p77 = pneg %p71
      %p78 = scmp.eq.s32.totalorder %s20, 1
      %p79 = por %p77, %p78
      %p80 = scmp.ne.s32.totalorder %s72, %s75
      %p81 = scmp.eq.s32.totalorder %s20, 0
      %p82 = por %p80, %p81
      %p83 = scmp.ne.s32.totalorder %s72, %s75
      %p84 = scmp.eq.s32.totalorder %s25, 1
      %p85 = por %p83, %p84
      %p86 = scmp.ne.s32.totalorder %s75, %s76
      %p87 = scmp.eq.s32.totalorder %s25, 0
      %p88 = por %p86, %p87
      %p89 = scmp.ne.s32.totalorder %s75, %s76
      %p90 = scmp.eq.s32.totalorder %s26, 1
      %p91 = por %p89, %p90
      %p93 = scmp.ne.s32.totalorder %s76, %s92
      %p94 = scmp.eq.s32.totalorder %s26, 0
      %p95 = por %p93, %p94
      %s97 = sadd.s32 %s96, 1
      %p100 = scmp.eq.s32.totalorder %s20, 1
      %p101 = scmp.ne.s32.totalorder %s96, %s98
      %p102 = scmp.eq.s32.totalorder %s20, 0
      %p103 = por %p101, %p102
      %p104 = scmp.ne.s32.totalorder %s96, %s98
      %p105 = scmp.eq.s32.totalorder %s25, 1
      %p106 = por %p104, %p105
      %p107 = scmp.ne.s32.totalorder %s98, %s99
      %p108 = scmp.eq.s32.totalorder %s25, 0
      %p109 = por %p107, %p108
      %p110 = scmp.ne.s32.totalorder %s98, %s99
      %p111 = scmp.eq.s32.totalorder %s26, 1
      %p112 = por %p110, %p111
      %p114 = scmp.ne.s32.totalorder %s99, %s113
      %p115 = scmp.eq.s32.totalorder %s26, 0
      %p116 = por %p114, %p115
      %s118 = sadd.s32 %s117, 1
      %p121 = scmp.eq.s32.totalorder %s20, 1
      %p122 = scmp.ne.s32.totalorder %s117, %s119
      %p123 = scmp.eq.s32.totalorder %s20, 0
      %p124 = por %p122, %p123
      %p125 = scmp.ne.s32.totalorder %s117, %s119
      %p126 = scmp.eq.s32.totalorder %s25, 1
      %p127 = por %p125, %p126
      %p128 = scmp.ne.s32.totalorder %s119, %s120
      %p129 = scmp.eq.s32.totalorder %s25, 0
      %p130 = por %p128, %p129
      %p131 = scmp.ne.s32.totalorder %s119, %s120
      %p132 = scmp.eq.s32.totalorder %s26, 1
      %p133 = por %p131, %p132
      %p135 = scmp.ne.s32.totalorder %s120, %s134
      %p136 = scmp.eq.s32.totalorder %s26, 0
      %p137 = por %p135, %p136
      %s139 = sadd.s32 %s138, 1
      %p142 = scmp.eq.s32.totalorder %s20, 1
      %p143 = scmp.ne.s32.totalorder %s138, %s140
      %p144 = scmp.eq.s32.totalorder %s20, 0
      %p145 = por %p143, %p144
      %p146 = scmp.ne.s32.totalorder %s138, %s140
      %p147 = scmp.eq.s32.totalorder %s25, 1
      %p148 = por %p146, %p147
      %p149 = scmp.ne.s32.totalorder %s140, %s141
      %p150 = scmp.eq.s32.totalorder %s25, 0
      %p151 = por %p149, %p150
      %p152 = scmp.ne.s32.totalorder %s140, %s141
      %p153 = scmp.eq.s32.totalorder %s26, 1
      %p154 = por %p152, %p153
      %p156 = scmp.ne.s32.totalorder %s141, %s155
      %p157 = scmp.eq.s32.totalorder %s26, 0
      %p158 = por %p156, %p157
      %s160 = sadd.s32 %s159, 1
      %p163 = scmp.eq.s32.totalorder %s20, 1
      %p164 = scmp.ne.s32.totalorder %s159, %s161
      %p165 = scmp.eq.s32.totalorder %s20, 0
      %p166 = por %p164, %p165
      %p167 = scmp.ne.s32.totalorder %s159, %s161
      %p168 = scmp.eq.s32.totalorder %s25, 1
      %p169 = por %p167, %p168
      %p170 = scmp.ne.s32.totalorder %s161, %s162
      %p171 = scmp.eq.s32.totalorder %s25, 0
      %p172 = por %p170, %p171
      %p173 = scmp.ne.s32.totalorder %s161, %s162
      %p174 = scmp.eq.s32.totalorder %s26, 1
      %p175 = por %p173, %p174
      %p177 = scmp.ne.s32.totalorder %s162, %s176
      %p178 = scmp.eq.s32.totalorder %s26, 0
      %p179 = por %p177, %p178
      %s181 = sadd.s32 %s180, 1
      %p184 = scmp.eq.s32.totalorder %s20, 1
      %p185 = scmp.ne.s32.totalorder %s180, %s182
      %p186 = scmp.eq.s32.totalorder %s20, 0
      %p187 = por %p185, %p186
      %p188 = scmp.ne.s32.totalorder %s180, %s182
      %p189 = scmp.eq.s32.totalorder %s25, 1
      %p190 = por %p188, %p189
      %p191 = scmp.ne.s32.totalorder %s182, %s183
      %p192 = scmp.eq.s32.totalorder %s25, 0
      %p193 = por %p191, %p192
      %p194 = scmp.ne.s32.totalorder %s182, %s183
      %p195 = scmp.eq.s32.totalorder %s26, 1
      %p196 = por %p194, %p195
      %p198 = scmp.ne.s32.totalorder %s183, %s197
      %p199 = scmp.eq.s32.totalorder %s26, 0
      %p200 = por %p198, %p199
      %s201 = ssub.s32 %s28, %s35
      %s202 = ssub.s32 %s27, %s39
      %s203 = sor.u32 %s201, %s202
      %p204 = scmp.eq.s32.totalorder %s203, 0
      %s206 = sadd.s32 %s205, 1
      %s207 = scalar_select %p204, %s205, %s206
      %p210 = pneg %p204
      %p211 = scmp.eq.s32.totalorder %s20, 1
      %p212 = por %p210, %p211
      %p213 = scmp.ne.s32.totalorder %s205, %s208
      %p214 = scmp.eq.s32.totalorder %s20, 0
      %p215 = por %p213, %p214
      %p216 = scmp.ne.s32.totalorder %s205, %s208
      %p217 = scmp.eq.s32.totalorder %s25, 1
      %p218 = por %p216, %p217
      %p219 = scmp.ne.s32.totalorder %s208, %s209
      %p220 = scmp.eq.s32.totalorder %s25, 0
      %p221 = por %p219, %p220
      %p222 = scmp.ne.s32.totalorder %s208, %s209
      %p223 = scmp.eq.s32.totalorder %s26, 1
      %p224 = por %p222, %p223
      %p226 = scmp.ne.s32.totalorder %s209, %s225
      %p227 = scmp.eq.s32.totalorder %s26, 0
      %p228 = por %p226, %p227
      %p229 = scmp.le.s32.totalorder 1, %s20
      %p230 = scmp.lt.s32.totalorder %s20, 3
      %p231 = pnand %p229, %p230
      %p232 = pneg %p231
      // Predicated region
      $region9: #{tpu_custom_call.1} parent=5 // pred_check
        _
      $region10: #{tpu_custom_call.1} parent=5 // pred_check_branch
        %234 = sbr.rel (%p231) target = $region12
      $region11: #{tpu_custom_call.1} parent=5 // pred_region
        %s235 = ssub.s32 %s20, 1
        // Predicated region
        $region13: #{tpu_custom_call.1} parent=11 // pred_check
          %p236 = pneg %p109
        $region14: #{tpu_custom_call.1} parent=11 // pred_check_branch
          %238 = sbr.rel (%p236) target = $region16
        $region15: #{tpu_custom_call.1} parent=11 // pred_region
          _
        $region16: #{tpu_custom_call.1} parent=11 // pred_fallthru
          _
        // Predicated region
        $region17: #{tpu_custom_call.1} parent=11 // pred_check
          %p239 = pneg %p130
        $region18: #{tpu_custom_call.1} parent=11 // pred_check_branch
          %241 = sbr.rel (%p239) target = $region20
        $region19: #{tpu_custom_call.1} parent=11 // pred_region
          _
        $region20: #{tpu_custom_call.1} parent=11 // pred_fallthru
          _
        // Predicated region
        $region21: #{tpu_custom_call.1} parent=11 // pred_check
          %p242 = pneg %p151
        $region22: #{tpu_custom_call.1} parent=11 // pred_check_branch
          %244 = sbr.rel (%p242) target = $region24
        $region23: #{tpu_custom_call.1} parent=11 // pred_region
          _
        $region24: #{tpu_custom_call.1} parent=11 // pred_fallthru
          _
        // Predicated region
        $region25: #{tpu_custom_call.1} parent=11 // pred_check
          %p245 = pneg %p172
        $region26: #{tpu_custom_call.1} parent=11 // pred_check_branch
          %247 = sbr.rel (%p245) target = $region28
        $region27: #{tpu_custom_call.1} parent=11 // pred_region
          _
        $region28: #{tpu_custom_call.1} parent=11 // pred_fallthru
          _
        // Predicated region
        $region29: #{tpu_custom_call.1} parent=11 // pred_check
          %p248 = pneg %p193
        $region30: #{tpu_custom_call.1} parent=11 // pred_check_branch
          %250 = sbr.rel (%p248) target = $region32
        $region31: #{tpu_custom_call.1} parent=11 // pred_region
          _
        $region32: #{tpu_custom_call.1} parent=11 // pred_fallthru
          _
      $region12: #{tpu_custom_call.1} parent=5 // pred_fallthru
        _
      %p251 = scmp.lt.s32.totalorder %s20, 2
      // Predicated region
      $region33: #{tpu_custom_call.1} parent=5 // pred_check
        %p252 = pneg %p251
      $region34: #{tpu_custom_call.1} parent=5 // pred_check_branch
        %254 = sbr.rel (%p252) target = $region36
      $region35: #{tpu_custom_call.1} parent=5 // pred_region
        // Predicated region
        $region37: #{tpu_custom_call.1} parent=35 // pred_check
          %p255 = pneg %p54
        $region38: #{tpu_custom_call.1} parent=35 // pred_check_branch
          %257 = sbr.rel (%p255) target = $region40
        $region39: #{tpu_custom_call.1} parent=35 // pred_region
          %s258 = sand.u32 %s44, 1
          %s259 = scalar_lea.sflag [#allocation4], %s258
          %s260 = sand.u32 %s44, 1
          %s261 = smul.addr %s260, 8
          %s262 = scalar_lea.vmem [#allocation3], %s261
          %s263 = smul.u32 2, %s27
          %s265 = ssub.s32 128, 128
          %266 = vsyncadd %s259, %s265
          %s267 = smul.addr %s28, 2
          %s268 = sadd.s32 %s263, %s267
          %s269 = smul.addr %s268, 64
          %s270 = scalar_lea.hbm %s0, %s269
          %s272 = sshll.u32 %s262, 4
          %s273 = int_to_ptr.vmem [resolvable:$true] %s272
          %275 = dma.hbm_to_vmem [thread:$0]  %s270, 128, %s273, %s259
        $region40: #{tpu_custom_call.1} parent=35 // pred_fallthru
          _
        // Predicated region
        $region41: #{tpu_custom_call.1} parent=35 // pred_check
          %p276 = pneg %p82
        $region42: #{tpu_custom_call.1} parent=35 // pred_check_branch
          %278 = sbr.rel (%p276) target = $region44
        $region43: #{tpu_custom_call.1} parent=35 // pred_region
          %s279 = smul.u32 2, %s27
          %p280 = scmp.lt.s32.totalorder %s28, 1
          %s281 = scalar_select %p280, %s28, 1
          %p282 = scmp.lt.s32.totalorder %s279, 1
          %s283 = scalar_select %p282, %s279, 1
          %s284 = smul.addr %s281, 2
          %s285 = sadd.s32 %s283, %s284
          %s286 = smul.addr %s285, 8
          %s287 = scalar_lea.vmem %s1, %s286
          %s288 = smul.u32 2, %s27
        $region44: #{tpu_custom_call.1} parent=35 // pred_fallthru
          _
      $region36: #{tpu_custom_call.1} parent=5 // pred_fallthru
        _
      %p289 = scmp.le.s32.totalorder 1, %s20
      %p290 = scmp.lt.s32.totalorder %s20, 3
      %p291 = pnand %p289, %p290
      %p292 = pneg %p291
      // Predicated region
      $region45: #{tpu_custom_call.1} parent=5 // pred_check
        _
      $region46: #{tpu_custom_call.1} parent=5 // pred_check_branch
        %294 = sbr.rel (%p291) target = $region48
      $region47: #{tpu_custom_call.1} parent=5 // pred_region
        %s295 = ssub.s32 %s20, 1
        %s296 = sand.u32 %s47, 1
        %s297 = scalar_lea.sflag [#allocation4], %s296
        %s298 = sand.u32 %s47, 1
        %s299 = smul.addr %s298, 8
        %s300 = scalar_lea.vmem [#allocation3], %s299
        // Predicated region
        $region49: #{tpu_custom_call.1} parent=47 // pred_check
          %p301 = pneg %p60
        $region50: #{tpu_custom_call.1} parent=47 // pred_check_branch
          %303 = sbr.rel (%p301) target = $region52
        $region51: #{tpu_custom_call.1} parent=47 // pred_region
          %304 = dma.done %s297, 128
        $region52: #{tpu_custom_call.1} parent=47 // pred_fallthru
          _
        %s305 = sand.u32 %s47, 1
        %s306 = scalar_lea.sflag [#allocation4], %s305
        %s307 = sand.u32 %s47, 1
        %s308 = smul.addr %s307, 8
        %s309 = scalar_lea.vmem [#allocation3], %s308
        %p310 = pneg %p60
        %p311 = pneg %p57
        %s312 = smul.u32 2, %s29
        %p313 = scmp.lt.s32.totalorder %s30, 1
        %s314 = scalar_select %p313, %s30, 1
        %p315 = scmp.lt.s32.totalorder %s312, 1
        %s316 = scalar_select %p315, %s312, 1
        %s317 = smul.addr %s314, 2
        %s318 = sadd.s32 %s316, %s317
        %s319 = smul.addr %s318, 8
        %s320 = scalar_lea.vmem %s1, %s319
        %p321 = pneg %p88
        %p322 = pneg %p85
        %p323 = pneg %p109
        %p324 = pneg %p106
        %p325 = pneg %p130
        %p326 = pneg %p127
        %p327 = pneg %p151
        %p328 = pneg %p148
        %p329 = pneg %p172
        %p330 = pneg %p169
        %p331 = pneg %p193
        %p332 = pneg %p190
        %p333 = pneg %p221
        %p334 = pneg %p218
        %s335 = sand.u32 %s208, 1
        %s336 = scalar_lea.sflag [#allocation5], %s335
        %s337 = sand.u32 %s208, 1
        %s338 = smul.addr %s337, 8
        %s339 = scalar_lea.vmem [#allocation6], %s338
        %s340 = smul.u32 2, %s29
        %s341 = smul.u32 2, %s29
        %p342 = scmp.lt.s32.totalorder %s30, 1
        %s343 = scalar_select %p342, %s30, 1
        %p344 = scmp.lt.s32.totalorder %s341, 1
        %s345 = scalar_select %p344, %s341, 1
        %s346 = smul.addr %s343, 2
        %s347 = sadd.s32 %s345, %s346
        %s348 = smul.addr %s347, 8
        %s349 = scalar_lea.vmem %s1, %s348
        %s350 = smul.u32 2, %s29
        %s351 = smul.u32 2, %s29
        %v352 = vld [vmem:[%s300] sm:$0xff]
        %v353 = vld [vmem:[%s349] sm:$0xff]
        %v354 = vld [vmem:[%s349 + $0x8] sm:$0xff]
        %v355 = vld [vmem:[%s2] sm:$0xff]
        %v356 = vld [vmem:[%s3] sm:$0xff]
        %vm357 = vcmask 64512
        %v359 = vsel %vm357, %v356, 0
        %361 = vmatprep.subr.mxu0 %v354
        %362 = vmatpush1.msra.mxu0 %v353
        %363 = vmatprep.subr.mxu0 0.0
        %364 = vmatpush1.msra.mxu0 0.0
        %365 = vmatprep.subr.mxu0 0.0
        %366 = vmatpush1.msra.mxu0 0.0
        %367 = vmatprep.subr.mxu0 0.0
        %368 = vmatpush1.msra.mxu0 0.0
        %369 = vmatprep.subr.mxu0 0.0
        %370 = vmatpush1.msra.mxu0 0.0
        %371 = vmatprep.subr.mxu0 0.0
        %372 = vmatpush1.msra.mxu0 0.0
        %373 = vmatprep.subr.mxu0 0.0
        %374 = vmatpush1.msra.mxu0 0.0
        %375 = vmatprep.subr.mxu0 0.0
        %376 = vmatpush1.msra.mxu0 0.0
        %377 = vmatprep.subr.mxu0 0.0
        %378 = vmatpush1.msra.mxu0 0.0
        %379 = vmatprep.subr.mxu0 0.0
        %380 = vmatpush1.msra.mxu0 0.0
        %381 = vmatprep.subr.mxu0 0.0
        %382 = vmatpush1.msra.mxu0 0.0
        %383 = vmatprep.subr.mxu0 0.0
        %384 = vmatpush1.msra.mxu0 0.0
        %385 = vmatprep.subr.mxu0 0.0
        %386 = vmatpush1.msra.mxu0 0.0
        %387 = vmatprep.subr.mxu0 0.0
        %388 = vmatpush1.msra.mxu0 0.0
        %389 = vmatprep.subr.mxu0 0.0
        %390 = vmatpush1.msra.mxu0 0.0
        %391 = vmatprep.subr.mxu0 0.0
        %392 = vmatpush1.msra.mxu0 0.0
        %393 = vmatprep.subr.mxu0 0.0
        %394 = vmatpush1.msra.mxu0 0.0
        %395 = vmatprep.subr.mxu0 0.0
        %396 = vmatpush1.msra.mxu0 0.0
        %397 = vmatprep.subr.mxu0 0.0
        %398 = vmatpush1.msra.mxu0 0.0
        %399 = vmatprep.subr.mxu0 0.0
        %400 = vmatpush1.msra.mxu0 0.0
        %401 = vmatprep.subr.mxu0 0.0
        %402 = vmatpush1.msra.mxu0 0.0
        %403 = vmatprep.subr.mxu0 0.0
        %404 = vmatpush1.msra.mxu0 0.0
        %405 = vmatprep.subr.mxu0 0.0
        %406 = vmatpush1.msra.mxu0 0.0
        %407 = vmatprep.subr.mxu0 0.0
        %408 = vmatpush1.msra.mxu0 0.0
        %409 = vmatprep.subr.mxu0 0.0
        %410 = vmatpush1.msra.mxu0 0.0
        %411 = vmatprep.subr.mxu0 0.0
        %412 = vmatpush1.msra.mxu0 0.0
        %413 = vmatprep.subr.mxu0 0.0
        %414 = vmatpush1.msra.mxu0 0.0
        %415 = vmatprep.subr.mxu0 0.0
        %416 = vmatpush1.msra.mxu0 0.0
        %417 = vmatprep.subr.mxu0 0.0
        %418 = vmatpush1.msra.mxu0 0.0
        %419 = vmatprep.subr.mxu0 0.0
        %420 = vmatpush1.msra.mxu0 0.0
        %421 = vmatprep.subr.mxu0 0.0
        %422 = vmatpush1.msra.mxu0 0.0
        %423 = vmatprep.subr.mxu0 0.0
        %424 = vmatpush1.msra.mxu0 0.0
        %425 = vmatprep.mubr.f32.mxu0 0.0
        %426 = vmatmul.mubr.f32.gmra.mrb[0].mxu0 %v359
        %v427 = vpop.f32.mrb[0].mxu0
        %v428 = vadd.f32 0.0, %v427
        %v429 = vpop.f32.mrb[0].mxu0
        %v430 = vadd.f32 0.0, %v429
        %431 = vdwg.mxu0
        %v433 = vcombine.high %v352, %v352
        %vm434 = vcmask 31744
        %v436 = vsel %vm434, %v355, 0
        %vm438 = vcmask 1043456
        %v439 = vsel %vm438, %v352, 0
        %v441 = vsel %vm438, %v433, 0
        %443 = vmatprep.subr.mxu0 %v441
        %444 = vmatpush1.msra.mxu0 %v439
        %445 = vmatprep.subr.mxu0 0.0
        %446 = vmatpush1.msra.mxu0 0.0
        %447 = vmatprep.subr.mxu0 0.0
        %448 = vmatpush1.msra.mxu0 0.0
        %449 = vmatprep.subr.mxu0 0.0
        %450 = vmatpush1.msra.mxu0 0.0
        %451 = vmatprep.subr.mxu0 0.0
        %452 = vmatpush1.msra.mxu0 0.0
        %453 = vmatprep.subr.mxu0 0.0
        %454 = vmatpush1.msra.mxu0 0.0
        %455 = vmatprep.subr.mxu0 0.0
        %456 = vmatpush1.msra.mxu0 0.0
        %457 = vmatprep.subr.mxu0 0.0
        %458 = vmatpush1.msra.mxu0 0.0
        %459 = vmatprep.subr.mxu0 0.0
        %460 = vmatpush1.msra.mxu0 0.0
        %461 = vmatprep.subr.mxu0 0.0
        %462 = vmatpush1.msra.mxu0 0.0
        %463 = vmatprep.subr.mxu0 0.0
        %464 = vmatpush1.msra.mxu0 0.0
        %465 = vmatprep.subr.mxu0 0.0
        %466 = vmatpush1.msra.mxu0 0.0
        %467 = vmatprep.subr.mxu0 0.0
        %468 = vmatpush1.msra.mxu0 0.0
        %469 = vmatprep.subr.mxu0 0.0
        %470 = vmatpush1.msra.mxu0 0.0
        %471 = vmatprep.subr.mxu0 0.0
        %472 = vmatpush1.msra.mxu0 0.0
        %473 = vmatprep.subr.mxu0 0.0
        %474 = vmatpush1.msra.mxu0 0.0
        %475 = vmatprep.subr.mxu0 0.0
        %476 = vmatpush1.msra.mxu0 0.0
        %477 = vmatprep.subr.mxu0 0.0
        %478 = vmatpush1.msra.mxu0 0.0
        %479 = vmatprep.subr.mxu0 0.0
        %480 = vmatpush1.msra.mxu0 0.0
        %481 = vmatprep.subr.mxu0 0.0
        %482 = vmatpush1.msra.mxu0 0.0
        %483 = vmatprep.subr.mxu0 0.0
        %484 = vmatpush1.msra.mxu0 0.0
        %485 = vmatprep.subr.mxu0 0.0
        %486 = vmatpush1.msra.mxu0 0.0
        %487 = vmatprep.subr.mxu0 0.0
        %488 = vmatpush1.msra.mxu0 0.0
        %489 = vmatprep.subr.mxu0 0.0
        %490 = vmatpush1.msra.mxu0 0.0
        %491 = vmatprep.subr.mxu0 0.0
        %492 = vmatpush1.msra.mxu0 0.0
        %493 = vmatprep.subr.mxu0 0.0
        %494 = vmatpush1.msra.mxu0 0.0
        %495 = vmatprep.subr.mxu0 0.0
        %496 = vmatpush1.msra.mxu0 0.0
        %497 = vmatprep.subr.mxu0 0.0
        %498 = vmatpush1.msra.mxu0 0.0
        %499 = vmatprep.subr.mxu0 0.0
        %500 = vmatpush1.msra.mxu0 0.0
        %501 = vmatprep.subr.mxu0 0.0
        %502 = vmatpush1.msra.mxu0 0.0
        %503 = vmatprep.subr.mxu0 0.0
        %504 = vmatpush1.msra.mxu0 0.0
        %505 = vmatprep.subr.mxu0 0.0
        %506 = vmatpush1.msra.mxu0 0.0
        %507 = vmatprep.mubr.f32.mxu0 0.0
        %508 = vmatmul.mubr.f32.gmra.mrb[0].mxu0 %v436
        %v509 = vpop.f32.mrb[0].mxu0
        %v510 = vadd.f32 %v428, %v509
        %v511 = vpop.f32.mrb[0].mxu0
        %v512 = vadd.f32 %v430, %v511
        %513 = vdwg.mxu0
        %v514 = vld [vmem:[%s4] sm:$0xff]
        %516 = vset.pattern.permute.xlu0 0
        %517 = vperm.xlu0 %516, %v514
        %v518 = vpop.permute.xlu0 %517
        %v520 = vadd.f32 %v510, %v518
        %v521 = vadd.f32 %v512, %v518
        %v522 = vmax.f32 %v520, 0.0
        %v523 = vmax.f32 %v521, 0.0
        %v524 = vld [vmem:[%s5] sm:$0xff]
        %526 = vset.pattern.permute.xlu0 0
        %527 = vperm.xlu0 %526, %v524
        %v528 = vpop.permute.xlu0 %527
        %v530 = vmul.f32 %v522, %v528
        %v531 = vmul.f32 %v523, %v528
        %v532 = vrot.slane %v530, 4
        %v533 = vadd.f32 %v530, %v532
        %v534 = vrot.slane %v533, 2
        %v535 = vadd.f32 %v533, %v534
        %v536 = vrot.slane %v535, 1
        %v537 = vadd.f32 %v535, %v536
        %v538 = vrot.slane %v531, 4
        %v539 = vadd.f32 %v531, %v538
        %v540 = vrot.slane %v539, 2
        %v541 = vadd.f32 %v539, %v540
        %v542 = vrot.slane %v541, 1
        %v543 = vadd.f32 %v541, %v542
        %s544 = sld [smem:[#allocation2]]
        %v545 = vstv %s544
        %v546 = vadd.f32 %v537, %v545
        %v547 = vadd.f32 %v543, %v545
        %v548 = vxor.u32 %v546, 2147483648
        %v549 = vxor.u32 %v547, 2147483648
        %v550 = vmul.f32 %v548, 1.442695
        %v551 = vpow.pop %v550
        %v552 = vmul.f32 %v549, 1.442695
        %v553 = vpow.pop %v552
        %v554 = vadd.f32 %v551, 1.0
        %v555 = vadd.f32 %v553, 1.0
        %v556 = vrcp.pop %v554
        %v557 = vmul.f32 1.0, %v556
        %v558 = vrcp.pop %v555
        %v559 = vmul.f32 1.0, %v558
        %v562 = vcombine.low %v557, %v559
        %v564 = vmul.f32 %v352, %v562
        %565 = vst [vmem:[%s339] sm:$0xff] %v564
        %s566 = sand.u32 %s208, 1
        %s567 = scalar_lea.sflag [#allocation5], %s566
        %s568 = sand.u32 %s208, 1
        %s569 = smul.addr %s568, 8
        %s570 = scalar_lea.vmem [#allocation6], %s569
        // Predicated region
        $region53: #{tpu_custom_call.1} parent=47 // pred_check
          %p571 = pneg %p218
        $region54: #{tpu_custom_call.1} parent=47 // pred_check_branch
          %573 = sbr.rel (%p571) target = $region56
        $region55: #{tpu_custom_call.1} parent=47 // pred_region
          %s574 = smul.u32 2, %s29
          %s576 = ssub.s32 128, 128
          %577 = vsyncadd %s567, %s576
          %s578 = smul.addr %s30, 2
          %s579 = sadd.s32 %s574, %s578
          %s580 = smul.addr %s579, 64
          %s581 = scalar_lea.hbm %s7, %s580
          %s583 = sshll.u32 %s570, 4
          %s584 = int_to_ptr.vmem [resolvable:$true] %s583
          %586 = dma.vmem_to_hbm [thread:$0]  %s584, 128, %s581, %s567
        $region56: #{tpu_custom_call.1} parent=47 // pred_fallthru
          _
      $region48: #{tpu_custom_call.1} parent=5 // pred_fallthru
        _
      %p587 = scmp.le.s32.totalorder 2, %s20
      // Predicated region
      $region57: #{tpu_custom_call.1} parent=5 // pred_check
        %p588 = pneg %p587
      $region58: #{tpu_custom_call.1} parent=5 // pred_check_branch
        %590 = sbr.rel (%p588) target = $region60
      $region59: #{tpu_custom_call.1} parent=5 // pred_region
        %s591 = ssub.s32 %s20, 2
        // Predicated region
        $region61: #{tpu_custom_call.1} parent=59 // pred_check
          %p592 = pneg %p224
        $region62: #{tpu_custom_call.1} parent=59 // pred_check_branch
          %594 = sbr.rel (%p592) target = $region64
        $region63: #{tpu_custom_call.1} parent=59 // pred_region
          %s595 = sand.u32 %s209, 1
          %s596 = scalar_lea.sflag [#allocation5], %s595
          %s597 = sand.u32 %s209, 1
          %s598 = smul.addr %s597, 8
          %s599 = scalar_lea.vmem [#allocation6], %s598
          %600 = dma.done %s596, 128
        $region64: #{tpu_custom_call.1} parent=59 // pred_fallthru
          _
      $region60: #{tpu_custom_call.1} parent=5 // pred_fallthru
        _
    $region6: #{tpu_custom_call.1} parent=1 // loop_footer
      %s24 = sadd.s32 1, %s20
    $region7: #{tpu_custom_call.1} parent=1 // loop_footer_branch
      %19 = sbr.rel target = $region3
    $region8: #{tpu_custom_call.1} parent=1 // loop_exit
      _
    %601 = vsyncpa [#allocation4], 1
    %s602 = scalar_lea.sflag [#allocation4], 1
    %603 = vsyncpa %s602, 1
    %604 = vsyncpa [#allocation5], 1
    %s605 = scalar_lea.sflag [#allocation5], 1
    %606 = vsyncpa %s605, 1

</llo_original>
